<compile_context>
chip_gen: v5e
topology: v5e:2x2
jax: 0.10.0
libtpu: 0.0.40
codegen_flags: <defaults>
</compile_context>

<pallas_src>
import functools

import jax
import jax.numpy as jnp
from jax import lax
from jax.experimental import pallas as pl
from jax.experimental.pallas import tpu as pltpu


def _round_up(x, m):
    return (x + m - 1) // m * m


def low_rank_kernel(x_ref, aw_ref, bwT_ref, c_ref, o_ref, *, compute_dtype):
    # h = x @ A_eff  (T layer already folded in), f32 accumulation on the MXU.
    x = x_ref[...]
    if compute_dtype is not None:
        x = x.astype(compute_dtype)          # per-tile VPU cast, hidden under DMA
    h = jnp.dot(x, aw_ref[...], preferred_element_type=jnp.float32)
    # out = h @ B_w.T + c  (B_w pre-transposed in HBM -> canonical MXU feed).
    out = jnp.dot(h.astype(bwT_ref.dtype), bwT_ref[...],
                  preferred_element_type=jnp.float32)
    out = out + c_ref[...]                   # single folded bias, f32
    o_ref[...] = out.astype(o_ref.dtype)


_DEFAULT_VMEM_BUDGET = 48 * 1024 * 1024  # conservative: fits v5e/v6e (128 MiB) and v7x (64 MiB/TC)


def low_rank_transform_block(x, params, *, block_batch=1024, compute_dtype=None,
                             vmem_budget_bytes=_DEFAULT_VMEM_BUDGET):
    """Forward pass of LowRankTransformBlock.

    params use PyTorch nn.Linear layout:
      A_w (rank, in_dim), A_b (rank,), T_w (rank, rank), T_b (rank,),
      B_w (out_dim, rank), B_b (out_dim,)
    """
    orig_dtype = x.dtype
    batch, in_dim = x.shape
    rank = params["A_w"].shape[0]
    out_dim = params["B_w"].shape[0]

    f32 = jnp.float32
    hi = lax.Precision.HIGHEST

    # --- Offline affine fold (exact: all three layers are affine, no nonlinearity):
    #   T(A(x))    = x @ A_eff + b_eff,  A_eff = A_w.T @ T_w.T,  b_eff = T_w @ A_b + T_b
    #   B(T(A(x))) = (x @ A_eff) @ B_w.T + c,  c = B_w @ b_eff + B_b
    aw = params["A_w"].astype(f32)
    ab = params["A_b"].astype(f32)
    tw = params["T_w"].astype(f32)
    t_b = params["T_b"].astype(f32)
    bw = params["B_w"].astype(f32)
    bb = params["B_b"].astype(f32)

    a_eff = jnp.dot(aw.T, tw.T, precision=hi)        # (in_dim, rank)
    b_eff = jnp.dot(tw, ab, precision=hi) + t_b      # (rank,)
    bw_t = bw.T                                      # (rank, out_dim)  one-time HBM transpose
    c = jnp.dot(bw, b_eff, precision=hi) + bb        # (out_dim,)  bias fully folded

    # --- Lane-dense zero padding of the contracted / output minor dims to 128.
    rank_p = _round_up(rank, 128)
    out_p = _round_up(out_dim, 128)
    a_eff = jnp.pad(a_eff, ((0, 0), (0, rank_p - rank)))
    bw_t = jnp.pad(bw_t, ((0, rank_p - rank), (0, out_p - out_dim)))
    c = jnp.pad(c, (0, out_p - out_dim)).reshape(1, out_p)

    # Only cast the small, one-time weights here; x is cast per tile in-kernel.
    if compute_dtype is not None:                    # e.g. jnp.bfloat16 on v5e/v6e/v7x
        a_eff = a_eff.astype(compute_dtype)
        bw_t = bw_t.astype(compute_dtype)

    x_item = x.dtype.itemsize
    out_item = jnp.dtype(orig_dtype).itemsize
    weight_bytes = (a_eff.size + bw_t.size) * a_eff.dtype.itemsize + c.size * 4

    # --- Pick the largest batch tile fitting the VMEM budget:
    #     2x double-buffered x/out tiles + (conservatively 2x) resident weights.
    per_row = 2 * (in_dim * x_item + out_p * out_item)
    tb_cap = max((vmem_budget_bytes - 2 * weight_bytes) // per_row, 8)
    tb = min(block_batch, int(tb_cap))
    if tb >= batch:
        tb = batch                        # single block spans the whole (possibly ragged) batch
    else:
        tb = max(_round_up(tb, 8), 8)     # ragged last block handled by the grid (no wrapper pad)

    grid = (pl.cdiv(batch, tb),)

    needed_vmem = per_row * tb + 2 * weight_bytes + (2 << 20)
    vmem_limit = int(min(max(needed_vmem, 32 << 20), 64 << 20))

    cost = pl.CostEstimate(
        flops=2 * batch * (in_dim * rank_p + rank_p * out_p),
        transcendentals=0,
        bytes_accessed=batch * in_dim * x_item + weight_bytes + batch * out_p * out_item,
    )

    kernel = functools.partial(low_rank_kernel, compute_dtype=compute_dtype)

    out = pl.pallas_call(
        kernel,
        out_shape=jax.ShapeDtypeStruct((batch, out_p), orig_dtype),
        grid=grid,
        in_specs=[
            pl.BlockSpec((tb, in_dim), lambda i: (i, 0)),            # x: streamed per batch tile
            pl.BlockSpec((in_dim, rank_p), lambda i: (0, 0),
                         pipeline_mode=pl.Buffered(1)),              # A_eff: resident, single-buffered
            pl.BlockSpec((rank_p, out_p), lambda i: (0, 0),
                         pipeline_mode=pl.Buffered(1)),              # B_w.T: resident, single-buffered
            pl.BlockSpec((1, out_p), lambda i: (0, 0),
                         pipeline_mode=pl.Buffered(1)),              # folded bias c: resident
        ],
        out_specs=pl.BlockSpec((tb, out_p), lambda i: (i, 0)),
        compiler_params=pltpu.CompilerParams(
            dimension_semantics=("parallel",),
            vmem_limit_bytes=vmem_limit,
        ),
        cost_estimate=cost,
    )(x, a_eff, bw_t, c)

    # Padded output columns are exact zeros; slice only when padding was applied.
    if out_p != out_dim:
        out = out[:, :out_dim]
    return out


def init_params(key, in_dim, rank, out_dim, dtype=jnp.float32):
    """Deterministic synthetic init mimicking PyTorch Linear uniform(-1/sqrt(fan_in), ...)."""
    ks = jax.random.split(key, 6)

    def u(k, shape, fan_in):
        bound = 1.0 / (fan_in ** 0.5)
        return jax.random.uniform(k, shape, dtype, minval=-bound, maxval=bound)

    return {
        "A_w": u(ks[0], (rank, in_dim), in_dim),
        "A_b": u(ks[1], (rank,), in_dim),
        "T_w": u(ks[2], (rank, rank), rank),
        "T_b": u(ks[3], (rank,), rank),
        "B_w": u(ks[4], (out_dim, rank), rank),
        "B_b": u(ks[5], (out_dim,), rank),
    }


def reference(x, p):
    hi = lax.Precision.HIGHEST
    h = jnp.dot(x, p["A_w"].T, precision=hi) + p["A_b"]
    h = jnp.dot(h, p["T_w"].T, precision=hi) + p["T_b"]
    return jnp.dot(h, p["B_w"].T, precision=hi) + p["B_b"]


if __name__ == "__main__":
    key = jax.random.PRNGKey(0)
    batch, in_dim, rank, out_dim = 8, 32, 16, 32

    kx, kp = jax.random.split(key)
    x = jax.random.normal(kx, (batch, in_dim), jnp.float32)
    params = init_params(kp, in_dim, rank, out_dim)

    out = low_rank_transform_block(x, params)
    out = jax.block_until_ready(out)

    ref = reference(x, params)
    assert out.shape == (batch, out_dim)
    assert jnp.allclose(out, ref, atol=1e-4, rtol=1e-4), "mismatch vs reference"
    print("KERNEL_OK")
</pallas_src>

<mosaic_0001>
module attributes {stable_mosaic.version = 11 : i64} {
  func.func @low_rank_kernel(%arg0: i32, %arg1: memref<8x32xf32, #tpu.memory_space<vmem>>, %arg2: memref<32x128xf32, #tpu.memory_space<vmem>>, %arg3: memref<128x128xf32, #tpu.memory_space<vmem>>, %arg4: memref<1x128xf32, #tpu.memory_space<vmem>>, %arg5: memref<8x128xf32, #tpu.memory_space<vmem>>) attributes {dimension_semantics = [#tpu.dimension_semantics<parallel>], iteration_bounds = array<i64: 1>, scalar_prefetch = 0 : i64, scratch_operands = 0 : i64, tpu.core_type = #tpu.core_type<tc>, window_params = [{transform_indices = @transform_0, window_bounds = array<i64: 8, 32>}, {pipeline_mode = #tpu.pipeline_mode<synchronous>, transform_indices = @transform_1, window_bounds = array<i64: 32, 128>}, {pipeline_mode = #tpu.pipeline_mode<synchronous>, transform_indices = @transform_2, window_bounds = array<i64: 128, 128>}, {pipeline_mode = #tpu.pipeline_mode<synchronous>, transform_indices = @transform_3, window_bounds = array<i64: 1, 128>}, {transform_indices = @transform_4, window_bounds = array<i64: 8, 128>}]} {
    %c0 = arith.constant 0 : index
    %c0_0 = arith.constant 0 : index
    %0 = vector.load %arg1[%c0, %c0_0] : memref<8x32xf32, #tpu.memory_space<vmem>>, vector<8x32xf32>
    %c0_1 = arith.constant 0 : index
    %c0_2 = arith.constant 0 : index
    %1 = vector.load %arg2[%c0_1, %c0_2] : memref<32x128xf32, #tpu.memory_space<vmem>>, vector<32x128xf32>
    %cst = arith.constant dense<0.000000e+00> : vector<8x128xf32>
    %2 = tpu.matmul %0, %1, %cst {dimension_numbers = #tpu.dot_dimension_numbers<[1], [0], [0], [1], [0, 0, 1, 1], [], []>} : vector<8x32xf32>, vector<32x128xf32>, vector<8x128xf32> -> vector<8x128xf32>
    %c0_3 = arith.constant 0 : index
    %c0_4 = arith.constant 0 : index
    %3 = vector.load %arg3[%c0_3, %c0_4] : memref<128x128xf32, #tpu.memory_space<vmem>>, vector<128x128xf32>
    %cst_5 = arith.constant dense<0.000000e+00> : vector<8x128xf32>
    %4 = tpu.matmul %2, %3, %cst_5 {dimension_numbers = #tpu.dot_dimension_numbers<[1], [0], [0], [1], [0, 0, 1, 1], [], []>} : vector<8x128xf32>, vector<128x128xf32>, vector<8x128xf32> -> vector<8x128xf32>
    %c0_6 = arith.constant 0 : index
    %c0_7 = arith.constant 0 : index
    %5 = vector.load %arg4[%c0_6, %c0_7] : memref<1x128xf32, #tpu.memory_space<vmem>>, vector<1x128xf32>
    %6 = vector.broadcast %5 : vector<1x128xf32> to vector<8x128xf32>
    %7 = arith.addf %4, %6 : vector<8x128xf32>
    %c0_8 = arith.constant 0 : index
    %c0_9 = arith.constant 0 : index
    %8 = vector.load %arg5[%c0_8, %c0_9] : memref<8x128xf32, #tpu.memory_space<vmem>>, vector<8x128xf32>
    tpu.vector_store %arg5[%c0_8, %c0_9], %7 {strides = array<i32>} : memref<8x128xf32, #tpu.memory_space<vmem>>, vector<8x128xf32>,
    return
  }
  func.func @transform_0(%arg0: i32) -> (i32, i32) {
    %c0_i32 = arith.constant 0 : i32
    %c0_i32_0 = arith.constant 0 : i32
    return %arg0, %c0_i32 : i32, i32
  }
  func.func @transform_1(%arg0: i32) -> (i32, i32) {
    %c0_i32 = arith.constant 0 : i32
    %c0_i32_0 = arith.constant 0 : i32
    %c0_i32_1 = arith.constant 0 : i32
    return %c0_i32, %c0_i32_0 : i32, i32
  }
  func.func @transform_2(%arg0: i32) -> (i32, i32) {
    %c0_i32 = arith.constant 0 : i32
    %c0_i32_0 = arith.constant 0 : i32
    %c0_i32_1 = arith.constant 0 : i32
    return %c0_i32, %c0_i32_0 : i32, i32
  }
  func.func @transform_3(%arg0: i32) -> (i32, i32) {
    %c0_i32 = arith.constant 0 : i32
    %c0_i32_0 = arith.constant 0 : i32
    %c0_i32_1 = arith.constant 0 : i32
    return %c0_i32, %c0_i32_0 : i32, i32
  }
  func.func @transform_4(%arg0: i32) -> (i32, i32) {
    %c0_i32 = arith.constant 0 : i32
    %c0_i32_0 = arith.constant 0 : i32
    return %arg0, %c0_i32 : i32, i32
  }
}

</mosaic_0001>

<llo_original>
// kernel: tpu_custom_call.1
$region0: #{tpu_custom_call.1}
  #allocation0 [shape = 'u32[]', space=smem, size = 0x4, offset = 0x4, fixed_abs, tag = 'smem constant byte address 0x4 - core index']
  #allocation1 [shape = 'u32[72,128]{1,0:T(1,128)}', space=vmem, size = 0x9000, scoped, tag = 'internal scratch']
  %s0 = inlined_call_operand.hbm [shape: f32[8,32], index: 0, kind: input, shape index: {}]
  %s1 = inlined_call_operand.hbm [shape: f32[32,128], index: 1, kind: input, shape index: {}]
  %s2 = inlined_call_operand.hbm [shape: f32[128,128], index: 2, kind: input, shape index: {}]
  %s3 = inlined_call_operand.vmem [shape: f32[1,128], index: 3, kind: input, shape index: {}]
  %s4 = inlined_call_operand.hbm [shape: f32[8,128], index: 4, kind: output, shape index: {}]
  %s5 = sld [smem:[#allocation0]]
  $region38: #{tpu_custom_call.1} parent=0
    _
  %s7 = ssub.s32 1, %s5
  %s8 = scalar_select 0, %s7, %s5
  $region1: #{tpu_custom_call.1} parent=0
    #allocation2 [shape = 'u8[4096]{0}', space=vmem, size = 0x1000, scoped, tag = 'input window, operand 0, single buffered']
    #allocation3 [shape = 's32[1]{0}', space=sflag, size = 0x4, scoped, tag = 'scoped memory for tpu_custom_call.1']
    #allocation4 [shape = 's32[1]{0}', space=sflag, size = 0x4, scoped, tag = 'scoped memory for tpu_custom_call.1']
    #allocation5 [shape = 'u8[16384]{0}', space=vmem, size = 0x4000, scoped, tag = 'input window, operand 1, single buffered']
    #allocation6 [shape = 's32[1]{0}', space=sflag, size = 0x4, scoped, tag = 'scoped memory for tpu_custom_call.1']
    #allocation7 [shape = 'u8[65536]{0}', space=vmem, size = 0x10000, scoped, tag = 'input window, operand 2, single buffered']
    #allocation8 [shape = 'u8[4096]{0}', space=vmem, size = 0x1000, scoped, tag = 'output window, operand 0, single buffered']
    %9 = vsyncpa [#allocation3], 0
    %10 = vsyncpa [#allocation6], 0
    %11 = vsyncpa [#allocation4], 0
    // Predicated region
    $region2: #{tpu_custom_call.1} parent=1 // pred_check
      _
    $region3: #{tpu_custom_call.1} parent=1 // pred_check_branch
      %13 = sbr.rel (0) target = $region5
    $region4: #{tpu_custom_call.1} parent=1 // pred_region
      %15 = vsyncadd [#allocation3], 0
      %s17 = sshll.u32 %s0, 4
      %s18 = int_to_ptr.hbm [resolvable:$true] %s17
      %s19 = sshll.u32 [#allocation2], 4
      %s20 = int_to_ptr.vmem [resolvable:$true] %s19
      %22 = dma.hbm_to_vmem [thread:$0]  %s18, 128, %s20, [#allocation3]
    $region5: #{tpu_custom_call.1} parent=1 // pred_fallthru
      _
    // Predicated region
    $region6: #{tpu_custom_call.1} parent=1 // pred_check
      _
    $region7: #{tpu_custom_call.1} parent=1 // pred_check_branch
      %24 = sbr.rel (0) target = $region9
    $region8: #{tpu_custom_call.1} parent=1 // pred_region
      %26 = vsyncadd [#allocation6], 0
      %s27 = sshll.u32 %s1, 4
      %s28 = int_to_ptr.hbm [resolvable:$true] %s27
      %s29 = sshll.u32 [#allocation5], 4
      %s30 = int_to_ptr.vmem [resolvable:$true] %s29
      %35 = dma.hbm_to_vmem [thread:$0]  %s28, 512, %s30, [#allocation6], 128, 128, 8
    $region9: #{tpu_custom_call.1} parent=1 // pred_fallthru
      _
    // Predicated region
    $region10: #{tpu_custom_call.1} parent=1 // pred_check
      _
    $region11: #{tpu_custom_call.1} parent=1 // pred_check_branch
      %37 = sbr.rel (0) target = $region13
    $region12: #{tpu_custom_call.1} parent=1 // pred_region
      %39 = vsyncadd [#allocation6], 0
      %s40 = sshll.u32 %s2, 4
      %s41 = int_to_ptr.hbm [resolvable:$true] %s40
      %s42 = sshll.u32 [#allocation7], 4
      %s43 = int_to_ptr.vmem [resolvable:$true] %s42
      %48 = dma.hbm_to_vmem [thread:$0]  %s41, 2048, %s43, [#allocation6], 128, 128, 8
    $region13: #{tpu_custom_call.1} parent=1 // pred_fallthru
      _
    // Predicated region
    $region14: #{tpu_custom_call.1} parent=1 // pred_check
      _
    $region15: #{tpu_custom_call.1} parent=1 // pred_check_branch
      %50 = sbr.rel (0) target = $region17
    $region16: #{tpu_custom_call.1} parent=1 // pred_region
      _
    $region17: #{tpu_custom_call.1} parent=1 // pred_fallthru
      _
    // Predicated region
    $region18: #{tpu_custom_call.1} parent=1 // pred_check
      _
    $region19: #{tpu_custom_call.1} parent=1 // pred_check_branch
      %52 = sbr.rel (0) target = $region21
    $region20: #{tpu_custom_call.1} parent=1 // pred_region
      %54 = dma.done [#allocation3], 128
    $region21: #{tpu_custom_call.1} parent=1 // pred_fallthru
      _
    // Predicated region
    $region22: #{tpu_custom_call.1} parent=1 // pred_check
      _
    $region23: #{tpu_custom_call.1} parent=1 // pred_check_branch
      %56 = sbr.rel (0) target = $region25
    $region24: #{tpu_custom_call.1} parent=1 // pred_region
      %58 = dma.done [#allocation6], 512
    $region25: #{tpu_custom_call.1} parent=1 // pred_fallthru
      _
    // Predicated region
    $region26: #{tpu_custom_call.1} parent=1 // pred_check
      _
    $region27: #{tpu_custom_call.1} parent=1 // pred_check_branch
      %60 = sbr.rel (0) target = $region29
    $region28: #{tpu_custom_call.1} parent=1 // pred_region
      %62 = dma.done [#allocation6], 2048
    $region29: #{tpu_custom_call.1} parent=1 // pred_fallthru
      _
    %v63 = vld [vmem:[#allocation2] sm:$0xff]
    %v64 = vld [vmem:[#allocation5] sm:$0xff]
    %v65 = vld [vmem:[#allocation5 + $0x8] sm:$0xff]
    %v66 = vld [vmem:[#allocation5 + $0x10] sm:$0xff]
    %v67 = vld [vmem:[#allocation5 + $0x18] sm:$0xff]
    %vm68 = vcmask 261120
    %v70 = vsel %vm68, %v63, 0
    %72 = vmatpush.msra.mxu0 0.0
    %73 = vmatpush.msra.mxu0 0.0
    %74 = vmatpush.msra.mxu0 0.0
    %75 = vmatpush.msra.mxu0 0.0
    %76 = vmatpush.msra.mxu0 0.0
    %77 = vmatpush.msra.mxu0 0.0
    %78 = vmatpush.msra.mxu0 0.0
    %79 = vmatpush.msra.mxu0 0.0
    %80 = vmatpush.msra.mxu0 0.0
    %81 = vmatpush.msra.mxu0 0.0
    %82 = vmatpush.msra.mxu0 0.0
    %83 = vmatpush.msra.mxu0 0.0
    %84 = vmatpush.msra.mxu0 %v67
    %85 = vmatpush.msra.mxu0 %v66
    %86 = vmatpush.msra.mxu0 %v65
    %87 = vmatpush.msra.mxu0 %v64
    %88 = vmatmul.f32.gmra.mxu0 %v70
    %v89 = vpop.f32.mrf.mxu0
    %v90 = vadd.f32 0.0, %v89
    %91 = vdwg.mxu0
    %v92 = vld [vmem:[#allocation7] sm:$0xff]
    %v93 = vld [vmem:[#allocation7 + $0x8] sm:$0xff]
    %v94 = vld [vmem:[#allocation7 + $0x10] sm:$0xff]
    %v95 = vld [vmem:[#allocation7 + $0x18] sm:$0xff]
    %v96 = vld [vmem:[#allocation7 + $0x20] sm:$0xff]
    %v97 = vld [vmem:[#allocation7 + $0x28] sm:$0xff]
    %v98 = vld [vmem:[#allocation7 + $0x30] sm:$0xff]
    %v99 = vld [vmem:[#allocation7 + $0x38] sm:$0xff]
    %v100 = vld [vmem:[#allocation7 + $0x40] sm:$0xff]
    %v101 = vld [vmem:[#allocation7 + $0x48] sm:$0xff]
    %v102 = vld [vmem:[#allocation7 + $0x50] sm:$0xff]
    %v103 = vld [vmem:[#allocation7 + $0x58] sm:$0xff]
    %v104 = vld [vmem:[#allocation7 + $0x60] sm:$0xff]
    %v105 = vld [vmem:[#allocation7 + $0x68] sm:$0xff]
    %v106 = vld [vmem:[#allocation7 + $0x70] sm:$0xff]
    %v107 = vld [vmem:[#allocation7 + $0x78] sm:$0xff]
    %v108 = vld [vmem:[%s3] sm:$0x1]
    %v110 = vperm.slane %v108, 0
    %112 = vmatpush.msra.mxu0 %v107
    %113 = vmatpush.msra.mxu0 %v106
    %114 = vmatpush.msra.mxu0 %v105
    %115 = vmatpush.msra.mxu0 %v104
    %116 = vmatpush.msra.mxu0 %v103
    %117 = vmatpush.msra.mxu0 %v102
    %118 = vmatpush.msra.mxu0 %v101
    %119 = vmatpush.msra.mxu0 %v100
    %120 = vmatpush.msra.mxu0 %v99
    %121 = vmatpush.msra.mxu0 %v98
    %122 = vmatpush.msra.mxu0 %v97
    %123 = vmatpush.msra.mxu0 %v96
    %124 = vmatpush.msra.mxu0 %v95
    %125 = vmatpush.msra.mxu0 %v94
    %126 = vmatpush.msra.mxu0 %v93
    %127 = vmatpush.msra.mxu0 %v92
    %128 = vmatmul.f32.gmra.mxu0 %v90
    %v129 = vpop.f32.mrf.mxu0
    %v130 = vadd.f32 %v110, %v129
    %131 = vdwg.mxu0
    %132 = vst [vmem:[#allocation8] sm:$0xff] %v130
    // Predicated region
    $region30: #{tpu_custom_call.1} parent=1 // pred_check
      _
    $region31: #{tpu_custom_call.1} parent=1 // pred_check_branch
      %134 = sbr.rel (0) target = $region33
    $region32: #{tpu_custom_call.1} parent=1 // pred_region
      %136 = vsyncadd [#allocation4], 0
      %s138 = sshll.u32 [#allocation8], 4
      %s139 = int_to_ptr.vmem [resolvable:$true] %s138
      %s140 = sshll.u32 %s4, 4
      %s141 = int_to_ptr.hbm [resolvable:$true] %s140
      %143 = dma.vmem_to_hbm [thread:$0]  %s139, 128, %s141, [#allocation4]
    $region33: #{tpu_custom_call.1} parent=1 // pred_fallthru
      _
    // Predicated region
    $region34: #{tpu_custom_call.1} parent=1 // pred_check
      _
    $region35: #{tpu_custom_call.1} parent=1 // pred_check_branch
      %145 = sbr.rel (0) target = $region37
    $region36: #{tpu_custom_call.1} parent=1 // pred_region
      %147 = dma.done [#allocation4], 128
    $region37: #{tpu_custom_call.1} parent=1 // pred_fallthru
      _
    %148 = vsyncpa [#allocation3], 1
    %149 = vsyncpa [#allocation6], 1
    %150 = vsyncpa [#allocation4], 1

</llo_original>
